<compile_context>
chip_gen: v7x
topology: tpu7x:2x2x1
jax: 0.10.0
libtpu: 0.0.40
codegen_flags: <defaults>
</compile_context>

<pallas_src>
import functools

import jax
import jax.numpy as jnp
from jax.experimental import pallas as pl
from jax.experimental.pallas import tpu as pltpu


def autoencoder_kernel(x_ref,
                       w1_ref, b1_ref, w2_ref, b2_ref, w3_ref, b3_ref,
                       w4_ref, b4_ref, w5_ref, b5_ref, w6_ref, b6_ref,
                       o_ref):
    # x_ref: (19, bn) f32, batch on the lane axis.
    h = x_ref[...]

    def layer(w_ref, b_ref, h, relu):
        # W: (out, in), h: (in, bn), b: (out, 1)  ->  (out, bn)
        y = jnp.dot(w_ref[...], h, preferred_element_type=jnp.float32) + b_ref[...]
        return jnp.maximum(y, 0.0) if relu else y

    # encoder
    h = layer(w1_ref, b1_ref, h, True)    # (15, bn)
    h = layer(w2_ref, b2_ref, h, True)    # (12, bn)
    h = layer(w3_ref, b3_ref, h, False)   # (8,  bn)
    # decoder
    h = layer(w4_ref, b4_ref, h, True)    # (12, bn)
    h = layer(w5_ref, b5_ref, h, True)    # (15, bn)
    h = layer(w6_ref, b6_ref, h, False)   # (19, bn)

    # Sigmoid: exp and approximate reciprocal both execute on the EUP slot,
    # leaving the VALU free (no f32 divide expansion).
    o_ref[...] = pl.reciprocal(1.0 + jnp.exp(-h), approx=True).astype(o_ref.dtype)


def prepare_params(params):
    """One-time host-side prep (hoisted out of the per-call path):
    keep PyTorch (out, in) weights as-is, reshape biases (out,) -> (out, 1)."""
    prepared = []
    for (W, b) in params:
        prepared.append((jnp.asarray(W, jnp.float32),
                         jnp.asarray(b, jnp.float32)[:, None]))
    return prepared


@functools.partial(jax.jit, static_argnames=("bn",))
def autoencoder_forward(x, prepared_params, *, bn=256):
    """x: (B, 19) float32. prepared_params: output of prepare_params().
    Returns (B, 19) float32.  `bn` is the lane (batch) tile; must be a
    multiple of 128 (256 recommended)."""
    B, F = x.shape
    assert F == 19
    assert bn % 128 == 0

    # Flip to batch-on-lanes layout and pad the batch to a multiple of bn.
    n_blocks = -(-B // bn)          # ceil-div; padded tail block, sliced off below
    B_pad = n_blocks * bn
    x_t = x.T                        # (19, B) -- lane-dense kernel input
    if B_pad != B:
        x_t = jnp.pad(x_t, ((0, 0), (0, B_pad - B)))

    flat_args = []
    weight_specs = []
    for (W, b) in prepared_params:
        flat_args += [W, b]
        # Constant index_map -> weight/bias blocks stay resident in VMEM
        # across all grid iterations (no per-tile re-fetch).
        weight_specs += [
            pl.BlockSpec(W.shape, lambda i: (0, 0)),
            pl.BlockSpec(b.shape, lambda i: (0, 0)),
        ]

    out_t = pl.pallas_call(
        autoencoder_kernel,
        out_shape=jax.ShapeDtypeStruct((19, B_pad), jnp.float32),
        grid_spec=pltpu.PrefetchScalarGridSpec(
            num_scalar_prefetch=0,
            grid=(n_blocks,),
            in_specs=[pl.BlockSpec((19, bn), lambda i: (0, i))] + weight_specs,
            out_specs=pl.BlockSpec((19, bn), lambda i: (0, i)),
        ),
        compiler_params=pltpu.CompilerParams(
            dimension_semantics=("parallel",)),
    )(x_t, *flat_args)

    return out_t[:, :B].T            # back to (B, 19)


def init_params(key):
    """Deterministic init mirroring nn.Linear shapes: W (out, in), b (out,)."""
    dims = [(19, 15), (15, 12), (12, 8), (8, 12), (12, 15), (15, 19)]
    params = []
    for (fan_in, fan_out) in dims:
        key, kw, kb = jax.random.split(key, 3)
        bound = 1.0 / jnp.sqrt(fan_in)
        W = jax.random.uniform(kw, (fan_out, fan_in), jnp.float32, -bound, bound)
        b = jax.random.uniform(kb, (fan_out,), jnp.float32, -bound, bound)
        params.append((W, b))
    return params


def reference_forward(x, params):
    h = x
    for idx, (W, b) in enumerate(params):
        h = h @ W.T + b
        if idx in (0, 1, 3, 4):
            h = jnp.maximum(h, 0.0)
    return jax.nn.sigmoid(h)


if __name__ == "__main__":
    key = jax.random.PRNGKey(0)
    kparams, kx = jax.random.split(key)
    params = init_params(kparams)
    prepared = prepare_params(params)        # hoisted one-time weight/bias prep

    B = 512                                  # two 256-wide lane tiles -> 2 grid steps
    x = jax.random.normal(kx, (B, 19), jnp.float32)

    out = autoencoder_forward(x, prepared, bn=256)
    out = jax.block_until_ready(out)

    ref = reference_forward(x, params)
    assert out.shape == (B, 19)
    # Slightly looser tolerance than exact math: approximate reciprocal in sigmoid.
    assert jnp.max(jnp.abs(out - ref)) < 2e-3

    print("KERNEL_OK")
</pallas_src>

<mosaic_0001>
module attributes {stable_mosaic.version = 11 : i64} {
  func.func @autoencoder_kernel(%arg0: i32, %arg1: memref<19x256xf32, #tpu.memory_space<vmem>>, %arg2: memref<15x19xf32, #tpu.memory_space<vmem>>, %arg3: memref<15x1xf32, #tpu.memory_space<vmem>>, %arg4: memref<12x15xf32, #tpu.memory_space<vmem>>, %arg5: memref<12x1xf32, #tpu.memory_space<vmem>>, %arg6: memref<8x12xf32, #tpu.memory_space<vmem>>, %arg7: memref<8x1xf32, #tpu.memory_space<vmem>>, %arg8: memref<12x8xf32, #tpu.memory_space<vmem>>, %arg9: memref<12x1xf32, #tpu.memory_space<vmem>>, %arg10: memref<15x12xf32, #tpu.memory_space<vmem>>, %arg11: memref<15x1xf32, #tpu.memory_space<vmem>>, %arg12: memref<19x15xf32, #tpu.memory_space<vmem>>, %arg13: memref<19x1xf32, #tpu.memory_space<vmem>>, %arg14: memref<19x256xf32, #tpu.memory_space<vmem>>) attributes {dimension_semantics = [#tpu.dimension_semantics<parallel>], iteration_bounds = array<i64: 2>, scalar_prefetch = 0 : i64, scratch_operands = 0 : i64, tpu.core_type = #tpu.core_type<tc>, window_params = [{transform_indices = @transform_0, window_bounds = array<i64: 19, 256>}, {pipeline_mode = #tpu.pipeline_mode<synchronous>, transform_indices = @transform_1, window_bounds = array<i64: 15, 19>}, {pipeline_mode = #tpu.pipeline_mode<synchronous>, transform_indices = @transform_2, window_bounds = array<i64: 15, 1>}, {pipeline_mode = #tpu.pipeline_mode<synchronous>, transform_indices = @transform_3, window_bounds = array<i64: 12, 15>}, {pipeline_mode = #tpu.pipeline_mode<synchronous>, transform_indices = @transform_4, window_bounds = array<i64: 12, 1>}, {pipeline_mode = #tpu.pipeline_mode<synchronous>, transform_indices = @transform_5, window_bounds = array<i64: 8, 12>}, {pipeline_mode = #tpu.pipeline_mode<synchronous>, transform_indices = @transform_6, window_bounds = array<i64: 8, 1>}, {pipeline_mode = #tpu.pipeline_mode<synchronous>, transform_indices = @transform_7, window_bounds = array<i64: 12, 8>}, {pipeline_mode = #tpu.pipeline_mode<synchronous>, transform_indices = @transform_8, window_bounds = array<i64: 12, 1>}, {pipeline_mode = #tpu.pipeline_mode<synchronous>, transform_indices = @transform_9, window_bounds = array<i64: 15, 12>}, {pipeline_mode = #tpu.pipeline_mode<synchronous>, transform_indices = @transform_10, window_bounds = array<i64: 15, 1>}, {pipeline_mode = #tpu.pipeline_mode<synchronous>, transform_indices = @transform_11, window_bounds = array<i64: 19, 15>}, {pipeline_mode = #tpu.pipeline_mode<synchronous>, transform_indices = @transform_12, window_bounds = array<i64: 19, 1>}, {transform_indices = @transform_13, window_bounds = array<i64: 19, 256>}]} {
    %c0 = arith.constant 0 : index
    %c0_0 = arith.constant 0 : index
    %0 = vector.load %arg1[%c0, %c0_0] : memref<19x256xf32, #tpu.memory_space<vmem>>, vector<19x256xf32>
    %c0_1 = arith.constant 0 : index
    %c0_2 = arith.constant 0 : index
    %1 = vector.load %arg2[%c0_1, %c0_2] : memref<15x19xf32, #tpu.memory_space<vmem>>, vector<15x19xf32>
    %cst = arith.constant dense<0.000000e+00> : vector<15x256xf32>
    %2 = tpu.matmul %1, %0, %cst {dimension_numbers = #tpu.dot_dimension_numbers<[1], [0], [0], [1], [0, 0, 1, 1], [], []>} : vector<15x19xf32>, vector<19x256xf32>, vector<15x256xf32> -> vector<15x256xf32>
    %c0_3 = arith.constant 0 : index
    %c0_4 = arith.constant 0 : index
    %3 = vector.load %arg3[%c0_3, %c0_4] : memref<15x1xf32, #tpu.memory_space<vmem>>, vector<15x1xf32>
    %4 = vector.broadcast %3 : vector<15x1xf32> to vector<15x256xf32>
    %5 = arith.addf %2, %4 : vector<15x256xf32>
    %cst_5 = arith.constant 0.000000e+00 : f32
    %6 = vector.broadcast %cst_5 : f32 to vector<15x256xf32>
    %7 = arith.maximumf %5, %6 : vector<15x256xf32>
    %c0_6 = arith.constant 0 : index
    %c0_7 = arith.constant 0 : index
    %8 = vector.load %arg4[%c0_6, %c0_7] : memref<12x15xf32, #tpu.memory_space<vmem>>, vector<12x15xf32>
    %cst_8 = arith.constant dense<0.000000e+00> : vector<12x256xf32>
    %9 = tpu.matmul %8, %7, %cst_8 {dimension_numbers = #tpu.dot_dimension_numbers<[1], [0], [0], [1], [0, 0, 1, 1], [], []>} : vector<12x15xf32>, vector<15x256xf32>, vector<12x256xf32> -> vector<12x256xf32>
    %c0_9 = arith.constant 0 : index
    %c0_10 = arith.constant 0 : index
    %10 = vector.load %arg5[%c0_9, %c0_10] : memref<12x1xf32, #tpu.memory_space<vmem>>, vector<12x1xf32>
    %11 = vector.broadcast %10 : vector<12x1xf32> to vector<12x256xf32>
    %12 = arith.addf %9, %11 : vector<12x256xf32>
    %cst_11 = arith.constant 0.000000e+00 : f32
    %13 = vector.broadcast %cst_11 : f32 to vector<12x256xf32>
    %14 = arith.maximumf %12, %13 : vector<12x256xf32>
    %c0_12 = arith.constant 0 : index
    %c0_13 = arith.constant 0 : index
    %15 = vector.load %arg6[%c0_12, %c0_13] : memref<8x12xf32, #tpu.memory_space<vmem>>, vector<8x12xf32>
    %cst_14 = arith.constant dense<0.000000e+00> : vector<8x256xf32>
    %16 = tpu.matmul %15, %14, %cst_14 {dimension_numbers = #tpu.dot_dimension_numbers<[1], [0], [0], [1], [0, 0, 1, 1], [], []>} : vector<8x12xf32>, vector<12x256xf32>, vector<8x256xf32> -> vector<8x256xf32>
    %c0_15 = arith.constant 0 : index
    %c0_16 = arith.constant 0 : index
    %17 = vector.load %arg7[%c0_15, %c0_16] : memref<8x1xf32, #tpu.memory_space<vmem>>, vector<8x1xf32>
    %18 = vector.broadcast %17 : vector<8x1xf32> to vector<8x256xf32>
    %19 = arith.addf %16, %18 : vector<8x256xf32>
    %c0_17 = arith.constant 0 : index
    %c0_18 = arith.constant 0 : index
    %20 = vector.load %arg8[%c0_17, %c0_18] : memref<12x8xf32, #tpu.memory_space<vmem>>, vector<12x8xf32>
    %cst_19 = arith.constant dense<0.000000e+00> : vector<12x256xf32>
    %21 = tpu.matmul %20, %19, %cst_19 {dimension_numbers = #tpu.dot_dimension_numbers<[1], [0], [0], [1], [0, 0, 1, 1], [], []>} : vector<12x8xf32>, vector<8x256xf32>, vector<12x256xf32> -> vector<12x256xf32>
    %c0_20 = arith.constant 0 : index
    %c0_21 = arith.constant 0 : index
    %22 = vector.load %arg9[%c0_20, %c0_21] : memref<12x1xf32, #tpu.memory_space<vmem>>, vector<12x1xf32>
    %23 = vector.broadcast %22 : vector<12x1xf32> to vector<12x256xf32>
    %24 = arith.addf %21, %23 : vector<12x256xf32>
    %cst_22 = arith.constant 0.000000e+00 : f32
    %25 = vector.broadcast %cst_22 : f32 to vector<12x256xf32>
    %26 = arith.maximumf %24, %25 : vector<12x256xf32>
    %c0_23 = arith.constant 0 : index
    %c0_24 = arith.constant 0 : index
    %27 = vector.load %arg10[%c0_23, %c0_24] : memref<15x12xf32, #tpu.memory_space<vmem>>, vector<15x12xf32>
    %cst_25 = arith.constant dense<0.000000e+00> : vector<15x256xf32>
    %28 = tpu.matmul %27, %26, %cst_25 {dimension_numbers = #tpu.dot_dimension_numbers<[1], [0], [0], [1], [0, 0, 1, 1], [], []>} : vector<15x12xf32>, vector<12x256xf32>, vector<15x256xf32> -> vector<15x256xf32>
    %c0_26 = arith.constant 0 : index
    %c0_27 = arith.constant 0 : index
    %29 = vector.load %arg11[%c0_26, %c0_27] : memref<15x1xf32, #tpu.memory_space<vmem>>, vector<15x1xf32>
    %30 = vector.broadcast %29 : vector<15x1xf32> to vector<15x256xf32>
    %31 = arith.addf %28, %30 : vector<15x256xf32>
    %cst_28 = arith.constant 0.000000e+00 : f32
    %32 = vector.broadcast %cst_28 : f32 to vector<15x256xf32>
    %33 = arith.maximumf %31, %32 : vector<15x256xf32>
    %c0_29 = arith.constant 0 : index
    %c0_30 = arith.constant 0 : index
    %34 = vector.load %arg12[%c0_29, %c0_30] : memref<19x15xf32, #tpu.memory_space<vmem>>, vector<19x15xf32>
    %cst_31 = arith.constant dense<0.000000e+00> : vector<19x256xf32>
    %35 = tpu.matmul %34, %33, %cst_31 {dimension_numbers = #tpu.dot_dimension_numbers<[1], [0], [0], [1], [0, 0, 1, 1], [], []>} : vector<19x15xf32>, vector<15x256xf32>, vector<19x256xf32> -> vector<19x256xf32>
    %c0_32 = arith.constant 0 : index
    %c0_33 = arith.constant 0 : index
    %36 = vector.load %arg13[%c0_32, %c0_33] : memref<19x1xf32, #tpu.memory_space<vmem>>, vector<19x1xf32>
    %37 = vector.broadcast %36 : vector<19x1xf32> to vector<19x256xf32>
    %38 = arith.addf %35, %37 : vector<19x256xf32>
    %cst_34 = arith.constant 0.000000e+00 : f32
    %39 = vector.broadcast %cst_34 : f32 to vector<19x256xf32>
    %40 = arith.subf %39, %38 : vector<19x256xf32>
    %41 = math.exp %40 : vector<19x256xf32>
    %cst_35 = arith.constant 1.000000e+00 : f32
    %42 = vector.broadcast %cst_35 : f32 to vector<19x256xf32>
    %43 = arith.addf %42, %41 : vector<19x256xf32>
    %44 = tpu.reciprocal %43 {approx = true} : vector<19x256xf32> -> vector<19x256xf32>
    %c0_36 = arith.constant 0 : index
    %c0_37 = arith.constant 0 : index
    %45 = vector.load %arg14[%c0_36, %c0_37] : memref<19x256xf32, #tpu.memory_space<vmem>>, vector<19x256xf32>
    tpu.vector_store %arg14[%c0_36, %c0_37], %44 {strides = array<i32>} : memref<19x256xf32, #tpu.memory_space<vmem>>, vector<19x256xf32>,
    return
  }
  func.func @transform_0(%arg0: i32) -> (i32, i32) {
    %c0_i32 = arith.constant 0 : i32
    %c0_i32_0 = arith.constant 0 : i32
    return %c0_i32, %arg0 : i32, i32
  }
  func.func @transform_1(%arg0: i32) -> (i32, i32) {
    %c0_i32 = arith.constant 0 : i32
    %c0_i32_0 = arith.constant 0 : i32
    %c0_i32_1 = arith.constant 0 : i32
    return %c0_i32, %c0_i32_0 : i32, i32
  }
  func.func @transform_2(%arg0: i32) -> (i32, i32) {
    %c0_i32 = arith.constant 0 : i32
    %c0_i32_0 = arith.constant 0 : i32
    %c0_i32_1 = arith.constant 0 : i32
    return %c0_i32, %c0_i32_0 : i32, i32
  }
  func.func @transform_3(%arg0: i32) -> (i32, i32) {
    %c0_i32 = arith.constant 0 : i32
    %c0_i32_0 = arith.constant 0 : i32
    %c0_i32_1 = arith.constant 0 : i32
    return %c0_i32, %c0_i32_0 : i32, i32
  }
  func.func @transform_4(%arg0: i32) -> (i32, i32) {
    %c0_i32 = arith.constant 0 : i32
    %c0_i32_0 = arith.constant 0 : i32
    %c0_i32_1 = arith.constant 0 : i32
    return %c0_i32, %c0_i32_0 : i32, i32
  }
  func.func @transform_5(%arg0: i32) -> (i32, i32) {
    %c0_i32 = arith.constant 0 : i32
    %c0_i32_0 = arith.constant 0 : i32
    %c0_i32_1 = arith.constant 0 : i32
    return %c0_i32, %c0_i32_0 : i32, i32
  }
  func.func @transform_6(%arg0: i32) -> (i32, i32) {
    %c0_i32 = arith.constant 0 : i32
    %c0_i32_0 = arith.constant 0 : i32
    %c0_i32_1 = arith.constant 0 : i32
    return %c0_i32, %c0_i32_0 : i32, i32
  }
  func.func @transform_7(%arg0: i32) -> (i32, i32) {
    %c0_i32 = arith.constant 0 : i32
    %c0_i32_0 = arith.constant 0 : i32
    %c0_i32_1 = arith.constant 0 : i32
    return %c0_i32, %c0_i32_0 : i32, i32
  }
  func.func @transform_8(%arg0: i32) -> (i32, i32) {
    %c0_i32 = arith.constant 0 : i32
    %c0_i32_0 = arith.constant 0 : i32
    %c0_i32_1 = arith.constant 0 : i32
    return %c0_i32, %c0_i32_0 : i32, i32
  }
  func.func @transform_9(%arg0: i32) -> (i32, i32) {
    %c0_i32 = arith.constant 0 : i32
    %c0_i32_0 = arith.constant 0 : i32
    %c0_i32_1 = arith.constant 0 : i32
    return %c0_i32, %c0_i32_0 : i32, i32
  }
  func.func @transform_10(%arg0: i32) -> (i32, i32) {
    %c0_i32 = arith.constant 0 : i32
    %c0_i32_0 = arith.constant 0 : i32
    %c0_i32_1 = arith.constant 0 : i32
    return %c0_i32, %c0_i32_0 : i32, i32
  }
  func.func @transform_11(%arg0: i32) -> (i32, i32) {
    %c0_i32 = arith.constant 0 : i32
    %c0_i32_0 = arith.constant 0 : i32
    %c0_i32_1 = arith.constant 0 : i32
    return %c0_i32, %c0_i32_0 : i32, i32
  }
  func.func @transform_12(%arg0: i32) -> (i32, i32) {
    %c0_i32 = arith.constant 0 : i32
    %c0_i32_0 = arith.constant 0 : i32
    %c0_i32_1 = arith.constant 0 : i32
    return %c0_i32, %c0_i32_0 : i32, i32
  }
  func.func @transform_13(%arg0: i32) -> (i32, i32) {
    %c0_i32 = arith.constant 0 : i32
    %c0_i32_0 = arith.constant 0 : i32
    return %c0_i32, %arg0 : i32, i32
  }
}

</mosaic_0001>

<llo_original>
// kernel: autoencoder_forward.1
$region0: #{autoencoder_forward.1}
  #allocation0 [shape = 'u32[]', space=smem, size = 0x4, offset = 0x4, fixed_abs, tag = 'smem constant byte address 0x4 - core index']
  #allocation1 [shape = 'u32[144,128]{1,0:T(1,128)}', space=vmem, size = 0x12000, scoped, tag = 'internal scratch']
  %s0 = inlined_call_operand.vmem [shape: f32[19,512], index: 0, kind: input, shape index: {}]
  %s1 = inlined_call_operand.vmem [shape: f32[15,19], index: 1, kind: input, shape index: {}]
  %s2 = inlined_call_operand.vmem [shape: f32[15,1], index: 2, kind: input, shape index: {}]
  %s3 = inlined_call_operand.vmem [shape: f32[12,15], index: 3, kind: input, shape index: {}]
  %s4 = inlined_call_operand.vmem [shape: f32[12,1], index: 4, kind: input, shape index: {}]
  %s5 = inlined_call_operand.vmem [shape: f32[8,12], index: 5, kind: input, shape index: {}]
  %s6 = inlined_call_operand.vmem [shape: f32[8,1], index: 6, kind: input, shape index: {}]
  %s7 = inlined_call_operand.vmem [shape: f32[12,8], index: 7, kind: input, shape index: {}]
  %s8 = inlined_call_operand.vmem [shape: f32[12,1], index: 8, kind: input, shape index: {}]
  %s9 = inlined_call_operand.vmem [shape: f32[15,12], index: 9, kind: input, shape index: {}]
  %s10 = inlined_call_operand.vmem [shape: f32[15,1], index: 10, kind: input, shape index: {}]
  %s11 = inlined_call_operand.vmem [shape: f32[19,15], index: 11, kind: input, shape index: {}]
  %s12 = inlined_call_operand.vmem [shape: f32[19,1], index: 12, kind: input, shape index: {}]
  %s13 = inlined_call_operand.hbm [shape: f32[19,512], index: 13, kind: output, shape index: {}]
  %s14 = sld [smem:[#allocation0]]
  $region108: #{autoencoder_forward.1} parent=0
    _
  %s16 = ssub.s32 1, %s14
  %s17 = scalar_select 0, %s16, %s14
  $region1: #{autoencoder_forward.1} parent=0
    #allocation2 [shape = 'u8[49152]{0}', space=vmem, size = 0xc000, scoped, tag = 'input window, operand 0']
    #allocation3 [shape = 'u8[49152]{0}', space=vmem, size = 0xc000, scoped, tag = 'output window, operand 0']
    #allocation4 [shape = 's32[2]{0}', space=sflag, size = 0x8, scoped, tag = 'scoped memory for autoencoder_forward.1']
    %18 = vsyncpa [#allocation4], 0
    %s19 = scalar_lea.sflag [#allocation4], 1
    %20 = vsyncpa %s19, 0
    loop: start=0, step=1, limit=4
    $region2: #{autoencoder_forward.1} parent=1 // loop_pre_header
      _
    $region3: #{autoencoder_forward.1} parent=1 // loop_header
      %s22 = sphi 0, %s26
      %p23 = scmp.ge.s32.totalorder %s22, 4
      %s32 = sphi 0, %s34
      %s35 = sphi 0, %s32
      %s36 = sphi 0, %s35
      %s52 = sphi 0, %s36
      %s56 = sphi 0, %s56
      %s58 = sphi 0, %s56
      %s59 = sphi 0, %s58
      %s73 = sphi 0, %s59
      %s77 = sphi 0, %s77
      %s79 = sphi 0, %s77
      %s80 = sphi 0, %s79
      %s94 = sphi 0, %s80
      %s98 = sphi 0, %s98
      %s100 = sphi 0, %s98
      %s101 = sphi 0, %s100
      %s115 = sphi 0, %s101
      %s119 = sphi 0, %s119
      %s121 = sphi 0, %s119
      %s122 = sphi 0, %s121
      %s136 = sphi 0, %s122
      %s140 = sphi 0, %s140
      %s142 = sphi 0, %s140
      %s143 = sphi 0, %s142
      %s157 = sphi 0, %s143
      %s161 = sphi 0, %s161
      %s163 = sphi 0, %s161
      %s164 = sphi 0, %s163
      %s178 = sphi 0, %s164
      %s182 = sphi 0, %s182
      %s184 = sphi 0, %s182
      %s185 = sphi 0, %s184
      %s199 = sphi 0, %s185
      %s203 = sphi 0, %s203
      %s205 = sphi 0, %s203
      %s206 = sphi 0, %s205
      %s220 = sphi 0, %s206
      %s224 = sphi 0, %s224
      %s226 = sphi 0, %s224
      %s227 = sphi 0, %s226
      %s241 = sphi 0, %s227
      %s245 = sphi 0, %s245
      %s247 = sphi 0, %s245
      %s248 = sphi 0, %s247
      %s262 = sphi 0, %s248
      %s266 = sphi 0, %s266
      %s268 = sphi 0, %s266
      %s269 = sphi 0, %s268
      %s283 = sphi 0, %s269
      %s287 = sphi 0, %s287
      %s289 = sphi 0, %s287
      %s290 = sphi 0, %s289
      %s304 = sphi 0, %s290
      %s310 = sphi 0, %s312
      %s313 = sphi 0, %s310
      %s314 = sphi 0, %s313
      %s330 = sphi 0, %s314
    $region4: #{autoencoder_forward.1} parent=1 // loop_header_branch
      %25 = sbr.rel (%p23) target = $region8
    $region5: #{autoencoder_forward.1} parent=1 // loop_body
      %s27 = ssub.s32 %s22, 1
      %s28 = ssub.s32 %s22, 2
      %s29 = sadd.s32 %s22, 1
      %s30 = ssub.s32 %s22, %s29
      %p31 = scmp.eq.s32.totalorder %s30, 0
      %s33 = sadd.s32 %s32, 1
      %s34 = scalar_select %p31, %s32, %s33
      %p37 = pneg %p31
      %p38 = scmp.eq.s32.totalorder %s22, 1
      %p39 = por %p37, %p38
      %p40 = scmp.ne.s32.totalorder %s32, %s35
      %p41 = scmp.eq.s32.totalorder %s22, 0
      %p42 = por %p40, %p41
      %p43 = scmp.ne.s32.totalorder %s32, %s35
      %p44 = scmp.eq.s32.totalorder %s27, 1
      %p45 = por %p43, %p44
      %p46 = scmp.ne.s32.totalorder %s35, %s36
      %p47 = scmp.eq.s32.totalorder %s27, 0
      %p48 = por %p46, %p47
      %p49 = scmp.ne.s32.totalorder %s35, %s36
      %p50 = scmp.eq.s32.totalorder %s28, 1
      %p51 = por %p49, %p50
      %p53 = scmp.ne.s32.totalorder %s36, %s52
      %p54 = scmp.eq.s32.totalorder %s28, 0
      %p55 = por %p53, %p54
      %s57 = sadd.s32 %s56, 1
      %p60 = scmp.eq.s32.totalorder %s22, 1
      %p61 = scmp.ne.s32.totalorder %s56, %s58
      %p62 = scmp.eq.s32.totalorder %s22, 0
      %p63 = por %p61, %p62
      %p64 = scmp.ne.s32.totalorder %s56, %s58
      %p65 = scmp.eq.s32.totalorder %s27, 1
      %p66 = por %p64, %p65
      %p67 = scmp.ne.s32.totalorder %s58, %s59
      %p68 = scmp.eq.s32.totalorder %s27, 0
      %p69 = por %p67, %p68
      %p70 = scmp.ne.s32.totalorder %s58, %s59
      %p71 = scmp.eq.s32.totalorder %s28, 1
      %p72 = por %p70, %p71
      %p74 = scmp.ne.s32.totalorder %s59, %s73
      %p75 = scmp.eq.s32.totalorder %s28, 0
      %p76 = por %p74, %p75
      %s78 = sadd.s32 %s77, 1
      %p81 = scmp.eq.s32.totalorder %s22, 1
      %p82 = scmp.ne.s32.totalorder %s77, %s79
      %p83 = scmp.eq.s32.totalorder %s22, 0
      %p84 = por %p82, %p83
      %p85 = scmp.ne.s32.totalorder %s77, %s79
      %p86 = scmp.eq.s32.totalorder %s27, 1
      %p87 = por %p85, %p86
      %p88 = scmp.ne.s32.totalorder %s79, %s80
      %p89 = scmp.eq.s32.totalorder %s27, 0
      %p90 = por %p88, %p89
      %p91 = scmp.ne.s32.totalorder %s79, %s80
      %p92 = scmp.eq.s32.totalorder %s28, 1
      %p93 = por %p91, %p92
      %p95 = scmp.ne.s32.totalorder %s80, %s94
      %p96 = scmp.eq.s32.totalorder %s28, 0
      %p97 = por %p95, %p96
      %s99 = sadd.s32 %s98, 1
      %p102 = scmp.eq.s32.totalorder %s22, 1
      %p103 = scmp.ne.s32.totalorder %s98, %s100
      %p104 = scmp.eq.s32.totalorder %s22, 0
      %p105 = por %p103, %p104
      %p106 = scmp.ne.s32.totalorder %s98, %s100
      %p107 = scmp.eq.s32.totalorder %s27, 1
      %p108 = por %p106, %p107
      %p109 = scmp.ne.s32.totalorder %s100, %s101
      %p110 = scmp.eq.s32.totalorder %s27, 0
      %p111 = por %p109, %p110
      %p112 = scmp.ne.s32.totalorder %s100, %s101
      %p113 = scmp.eq.s32.totalorder %s28, 1
      %p114 = por %p112, %p113
      %p116 = scmp.ne.s32.totalorder %s101, %s115
      %p117 = scmp.eq.s32.totalorder %s28, 0
      %p118 = por %p116, %p117
      %s120 = sadd.s32 %s119, 1
      %p123 = scmp.eq.s32.totalorder %s22, 1
      %p124 = scmp.ne.s32.totalorder %s119, %s121
      %p125 = scmp.eq.s32.totalorder %s22, 0
      %p126 = por %p124, %p125
      %p127 = scmp.ne.s32.totalorder %s119, %s121
      %p128 = scmp.eq.s32.totalorder %s27, 1
      %p129 = por %p127, %p128
      %p130 = scmp.ne.s32.totalorder %s121, %s122
      %p131 = scmp.eq.s32.totalorder %s27, 0
      %p132 = por %p130, %p131
      %p133 = scmp.ne.s32.totalorder %s121, %s122
      %p134 = scmp.eq.s32.totalorder %s28, 1
      %p135 = por %p133, %p134
      %p137 = scmp.ne.s32.totalorder %s122, %s136
      %p138 = scmp.eq.s32.totalorder %s28, 0
      %p139 = por %p137, %p138
      %s141 = sadd.s32 %s140, 1
      %p144 = scmp.eq.s32.totalorder %s22, 1
      %p145 = scmp.ne.s32.totalorder %s140, %s142
      %p146 = scmp.eq.s32.totalorder %s22, 0
      %p147 = por %p145, %p146
      %p148 = scmp.ne.s32.totalorder %s140, %s142
      %p149 = scmp.eq.s32.totalorder %s27, 1
      %p150 = por %p148, %p149
      %p151 = scmp.ne.s32.totalorder %s142, %s143
      %p152 = scmp.eq.s32.totalorder %s27, 0
      %p153 = por %p151, %p152
      %p154 = scmp.ne.s32.totalorder %s142, %s143
      %p155 = scmp.eq.s32.totalorder %s28, 1
      %p156 = por %p154, %p155
      %p158 = scmp.ne.s32.totalorder %s143, %s157
      %p159 = scmp.eq.s32.totalorder %s28, 0
      %p160 = por %p158, %p159
      %s162 = sadd.s32 %s161, 1
      %p165 = scmp.eq.s32.totalorder %s22, 1
      %p166 = scmp.ne.s32.totalorder %s161, %s163
      %p167 = scmp.eq.s32.totalorder %s22, 0
      %p168 = por %p166, %p167
      %p169 = scmp.ne.s32.totalorder %s161, %s163
      %p170 = scmp.eq.s32.totalorder %s27, 1
      %p171 = por %p169, %p170
      %p172 = scmp.ne.s32.totalorder %s163, %s164
      %p173 = scmp.eq.s32.totalorder %s27, 0
      %p174 = por %p172, %p173
      %p175 = scmp.ne.s32.totalorder %s163, %s164
      %p176 = scmp.eq.s32.totalorder %s28, 1
      %p177 = por %p175, %p176
      %p179 = scmp.ne.s32.totalorder %s164, %s178
      %p180 = scmp.eq.s32.totalorder %s28, 0
      %p181 = por %p179, %p180
      %s183 = sadd.s32 %s182, 1
      %p186 = scmp.eq.s32.totalorder %s22, 1
      %p187 = scmp.ne.s32.totalorder %s182, %s184
      %p188 = scmp.eq.s32.totalorder %s22, 0
      %p189 = por %p187, %p188
      %p190 = scmp.ne.s32.totalorder %s182, %s184
      %p191 = scmp.eq.s32.totalorder %s27, 1
      %p192 = por %p190, %p191
      %p193 = scmp.ne.s32.totalorder %s184, %s185
      %p194 = scmp.eq.s32.totalorder %s27, 0
      %p195 = por %p193, %p194
      %p196 = scmp.ne.s32.totalorder %s184, %s185
      %p197 = scmp.eq.s32.totalorder %s28, 1
      %p198 = por %p196, %p197
      %p200 = scmp.ne.s32.totalorder %s185, %s199
      %p201 = scmp.eq.s32.totalorder %s28, 0
      %p202 = por %p200, %p201
      %s204 = sadd.s32 %s203, 1
      %p207 = scmp.eq.s32.totalorder %s22, 1
      %p208 = scmp.ne.s32.totalorder %s203, %s205
      %p209 = scmp.eq.s32.totalorder %s22, 0
      %p210 = por %p208, %p209
      %p211 = scmp.ne.s32.totalorder %s203, %s205
      %p212 = scmp.eq.s32.totalorder %s27, 1
      %p213 = por %p211, %p212
      %p214 = scmp.ne.s32.totalorder %s205, %s206
      %p215 = scmp.eq.s32.totalorder %s27, 0
      %p216 = por %p214, %p215
      %p217 = scmp.ne.s32.totalorder %s205, %s206
      %p218 = scmp.eq.s32.totalorder %s28, 1
      %p219 = por %p217, %p218
      %p221 = scmp.ne.s32.totalorder %s206, %s220
      %p222 = scmp.eq.s32.totalorder %s28, 0
      %p223 = por %p221, %p222
      %s225 = sadd.s32 %s224, 1
      %p228 = scmp.eq.s32.totalorder %s22, 1
      %p229 = scmp.ne.s32.totalorder %s224, %s226
      %p230 = scmp.eq.s32.totalorder %s22, 0
      %p231 = por %p229, %p230
      %p232 = scmp.ne.s32.totalorder %s224, %s226
      %p233 = scmp.eq.s32.totalorder %s27, 1
      %p234 = por %p232, %p233
      %p235 = scmp.ne.s32.totalorder %s226, %s227
      %p236 = scmp.eq.s32.totalorder %s27, 0
      %p237 = por %p235, %p236
      %p238 = scmp.ne.s32.totalorder %s226, %s227
      %p239 = scmp.eq.s32.totalorder %s28, 1
      %p240 = por %p238, %p239
      %p242 = scmp.ne.s32.totalorder %s227, %s241
      %p243 = scmp.eq.s32.totalorder %s28, 0
      %p244 = por %p242, %p243
      %s246 = sadd.s32 %s245, 1
      %p249 = scmp.eq.s32.totalorder %s22, 1
      %p250 = scmp.ne.s32.totalorder %s245, %s247
      %p251 = scmp.eq.s32.totalorder %s22, 0
      %p252 = por %p250, %p251
      %p253 = scmp.ne.s32.totalorder %s245, %s247
      %p254 = scmp.eq.s32.totalorder %s27, 1
      %p255 = por %p253, %p254
      %p256 = scmp.ne.s32.totalorder %s247, %s248
      %p257 = scmp.eq.s32.totalorder %s27, 0
      %p258 = por %p256, %p257
      %p259 = scmp.ne.s32.totalorder %s247, %s248
      %p260 = scmp.eq.s32.totalorder %s28, 1
      %p261 = por %p259, %p260
      %p263 = scmp.ne.s32.totalorder %s248, %s262
      %p264 = scmp.eq.s32.totalorder %s28, 0
      %p265 = por %p263, %p264
      %s267 = sadd.s32 %s266, 1
      %p270 = scmp.eq.s32.totalorder %s22, 1
      %p271 = scmp.ne.s32.totalorder %s266, %s268
      %p272 = scmp.eq.s32.totalorder %s22, 0
      %p273 = por %p271, %p272
      %p274 = scmp.ne.s32.totalorder %s266, %s268
      %p275 = scmp.eq.s32.totalorder %s27, 1
      %p276 = por %p274, %p275
      %p277 = scmp.ne.s32.totalorder %s268, %s269
      %p278 = scmp.eq.s32.totalorder %s27, 0
      %p279 = por %p277, %p278
      %p280 = scmp.ne.s32.totalorder %s268, %s269
      %p281 = scmp.eq.s32.totalorder %s28, 1
      %p282 = por %p280, %p281
      %p284 = scmp.ne.s32.totalorder %s269, %s283
      %p285 = scmp.eq.s32.totalorder %s28, 0
      %p286 = por %p284, %p285
      %s288 = sadd.s32 %s287, 1
      %p291 = scmp.eq.s32.totalorder %s22, 1
      %p292 = scmp.ne.s32.totalorder %s287, %s289
      %p293 = scmp.eq.s32.totalorder %s22, 0
      %p294 = por %p292, %p293
      %p295 = scmp.ne.s32.totalorder %s287, %s289
      %p296 = scmp.eq.s32.totalorder %s27, 1
      %p297 = por %p295, %p296
      %p298 = scmp.ne.s32.totalorder %s289, %s290
      %p299 = scmp.eq.s32.totalorder %s27, 0
      %p300 = por %p298, %p299
      %p301 = scmp.ne.s32.totalorder %s289, %s290
      %p302 = scmp.eq.s32.totalorder %s28, 1
      %p303 = por %p301, %p302
      %p305 = scmp.ne.s32.totalorder %s290, %s304
      %p306 = scmp.eq.s32.totalorder %s28, 0
      %p307 = por %p305, %p306
      %s308 = ssub.s32 %s22, %s29
      %p309 = scmp.eq.s32.totalorder %s308, 0
      %s311 = sadd.s32 %s310, 1
      %s312 = scalar_select %p309, %s310, %s311
      %p315 = pneg %p309
      %p316 = scmp.eq.s32.totalorder %s22, 1
      %p317 = por %p315, %p316
      %p318 = scmp.ne.s32.totalorder %s310, %s313
      %p319 = scmp.eq.s32.totalorder %s22, 0
      %p320 = por %p318, %p319
      %p321 = scmp.ne.s32.totalorder %s310, %s313
      %p322 = scmp.eq.s32.totalorder %s27, 1
      %p323 = por %p321, %p322
      %p324 = scmp.ne.s32.totalorder %s313, %s314
      %p325 = scmp.eq.s32.totalorder %s27, 0
      %p326 = por %p324, %p325
      %p327 = scmp.ne.s32.totalorder %s313, %s314
      %p328 = scmp.eq.s32.totalorder %s28, 1
      %p329 = por %p327, %p328
      %p331 = scmp.ne.s32.totalorder %s314, %s330
      %p332 = scmp.eq.s32.totalorder %s28, 0
      %p333 = por %p331, %p332
      %p334 = scmp.le.s32.totalorder 1, %s22
      %p335 = scmp.lt.s32.totalorder %s22, 3
      %p336 = pnand %p334, %p335
      %p337 = pneg %p336
      // Predicated region
      $region9: #{autoencoder_forward.1} parent=5 // pred_check
        _
      $region10: #{autoencoder_forward.1} parent=5 // pred_check_branch
        %339 = sbr.rel (%p336) target = $region12
      $region11: #{autoencoder_forward.1} parent=5 // pred_region
        %s340 = ssub.s32 %s22, 1
        // Predicated region
        $region13: #{autoencoder_forward.1} parent=11 // pred_check
          %p341 = pneg %p69
        $region14: #{autoencoder_forward.1} parent=11 // pred_check_branch
          %343 = sbr.rel (%p341) target = $region16
        $region15: #{autoencoder_forward.1} parent=11 // pred_region
          _
        $region16: #{autoencoder_forward.1} parent=11 // pred_fallthru
          _
        // Predicated region
        $region17: #{autoencoder_forward.1} parent=11 // pred_check
          %p344 = pneg %p90
        $region18: #{autoencoder_forward.1} parent=11 // pred_check_branch
          %346 = sbr.rel (%p344) target = $region20
        $region19: #{autoencoder_forward.1} parent=11 // pred_region
          _
        $region20: #{autoencoder_forward.1} parent=11 // pred_fallthru
          _
        // Predicated region
        $region21: #{autoencoder_forward.1} parent=11 // pred_check
          %p347 = pneg %p111
        $region22: #{autoencoder_forward.1} parent=11 // pred_check_branch
          %349 = sbr.rel (%p347) target = $region24
        $region23: #{autoencoder_forward.1} parent=11 // pred_region
          _
        $region24: #{autoencoder_forward.1} parent=11 // pred_fallthru
          _
        // Predicated region
        $region25: #{autoencoder_forward.1} parent=11 // pred_check
          %p350 = pneg %p132
        $region26: #{autoencoder_forward.1} parent=11 // pred_check_branch
          %352 = sbr.rel (%p350) target = $region28
        $region27: #{autoencoder_forward.1} parent=11 // pred_region
          _
        $region28: #{autoencoder_forward.1} parent=11 // pred_fallthru
          _
        // Predicated region
        $region29: #{autoencoder_forward.1} parent=11 // pred_check
          %p353 = pneg %p153
        $region30: #{autoencoder_forward.1} parent=11 // pred_check_branch
          %355 = sbr.rel (%p353) target = $region32
        $region31: #{autoencoder_forward.1} parent=11 // pred_region
          _
        $region32: #{autoencoder_forward.1} parent=11 // pred_fallthru
          _
        // Predicated region
        $region33: #{autoencoder_forward.1} parent=11 // pred_check
          %p356 = pneg %p174
        $region34: #{autoencoder_forward.1} parent=11 // pred_check_branch
          %358 = sbr.rel (%p356) target = $region36
        $region35: #{autoencoder_forward.1} parent=11 // pred_region
          _
        $region36: #{autoencoder_forward.1} parent=11 // pred_fallthru
          _
        // Predicated region
        $region37: #{autoencoder_forward.1} parent=11 // pred_check
          %p359 = pneg %p195
        $region38: #{autoencoder_forward.1} parent=11 // pred_check_branch
          %361 = sbr.rel (%p359) target = $region40
        $region39: #{autoencoder_forward.1} parent=11 // pred_region
          _
        $region40: #{autoencoder_forward.1} parent=11 // pred_fallthru
          _
        // Predicated region
        $region41: #{autoencoder_forward.1} parent=11 // pred_check
          %p362 = pneg %p216
        $region42: #{autoencoder_forward.1} parent=11 // pred_check_branch
          %364 = sbr.rel (%p362) target = $region44
        $region43: #{autoencoder_forward.1} parent=11 // pred_region
          _
        $region44: #{autoencoder_forward.1} parent=11 // pred_fallthru
          _
        // Predicated region
        $region45: #{autoencoder_forward.1} parent=11 // pred_check
          %p365 = pneg %p237
        $region46: #{autoencoder_forward.1} parent=11 // pred_check_branch
          %367 = sbr.rel (%p365) target = $region48
        $region47: #{autoencoder_forward.1} parent=11 // pred_region
          _
        $region48: #{autoencoder_forward.1} parent=11 // pred_fallthru
          _
        // Predicated region
        $region49: #{autoencoder_forward.1} parent=11 // pred_check
          %p368 = pneg %p258
        $region50: #{autoencoder_forward.1} parent=11 // pred_check_branch
          %370 = sbr.rel (%p368) target = $region52
        $region51: #{autoencoder_forward.1} parent=11 // pred_region
          _
        $region52: #{autoencoder_forward.1} parent=11 // pred_fallthru
          _
        // Predicated region
        $region53: #{autoencoder_forward.1} parent=11 // pred_check
          %p371 = pneg %p279
        $region54: #{autoencoder_forward.1} parent=11 // pred_check_branch
          %373 = sbr.rel (%p371) target = $region56
        $region55: #{autoencoder_forward.1} parent=11 // pred_region
          _
        $region56: #{autoencoder_forward.1} parent=11 // pred_fallthru
          _
        // Predicated region
        $region57: #{autoencoder_forward.1} parent=11 // pred_check
          %p374 = pneg %p300
        $region58: #{autoencoder_forward.1} parent=11 // pred_check_branch
          %376 = sbr.rel (%p374) target = $region60
        $region59: #{autoencoder_forward.1} parent=11 // pred_region
          _
        $region60: #{autoencoder_forward.1} parent=11 // pred_fallthru
          _
      $region12: #{autoencoder_forward.1} parent=5 // pred_fallthru
        _
      %p377 = scmp.lt.s32.totalorder %s22, 2
      // Predicated region
      $region61: #{autoencoder_forward.1} parent=5 // pred_check
        %p378 = pneg %p377
      $region62: #{autoencoder_forward.1} parent=5 // pred_check_branch
        %380 = sbr.rel (%p378) target = $region64
      $region63: #{autoencoder_forward.1} parent=5 // pred_region
        // Predicated region
        $region65: #{autoencoder_forward.1} parent=63 // pred_check
          %p381 = pneg %p42
        $region66: #{autoencoder_forward.1} parent=63 // pred_check_branch
          %383 = sbr.rel (%p381) target = $region68
        $region67: #{autoencoder_forward.1} parent=63 // pred_region
          %s384 = sand.u32 %s32, 1
          %s385 = sand.u32 %s32, 1
          %s386 = smul.addr %s385, 48
          %s387 = scalar_lea.vmem [#allocation2], %s386
          %s388 = smul.u32 2, %s22
          %s389 = smul.addr %s388, 8
          %s390 = scalar_lea.vmem %s0, %s389
          // Predicated region
          $region69: #{autoencoder_forward.1} parent=67 // pred_check
            _
          $region70: #{autoencoder_forward.1} parent=67 // pred_check_branch
            %392 = sbr.rel (0) target = $region72
          $region71: #{autoencoder_forward.1} parent=67 // pred_region
            // Predicated region
            $region73: #{autoencoder_forward.1} parent=71 // pred_check
              _
            $region74: #{autoencoder_forward.1} parent=71 // pred_check_branch
              %394 = sbr.rel (0) target = $region76
            $region75: #{autoencoder_forward.1} parent=71 // pred_region
              loop: start=0, step=1, limit=1
              $region77: #{autoencoder_forward.1} parent=75 // loop_pre_header
                _
              $region78: #{autoencoder_forward.1} parent=75 // loop_header
                %s396 = sphi 0, %s400
                %p397 = scmp.ge.s32.totalorder %s396, 1
                %s401 = sphi %s390, %s390
                %s402 = sphi %s387, %s387
              $region79: #{autoencoder_forward.1} parent=75 // loop_header_branch
                %399 = sbr.rel (%p397) target = $region83
              $region80: #{autoencoder_forward.1} parent=75 // loop_body
                %v403 = vld [vmem:[%s401] sm:$0xff]
                %404 = vst [vmem:[%s402] sm:$0xff] %v403
                %v405 = vld [vmem:[%s401 + $0x8] sm:$0xff]
                %406 = vst [vmem:[%s402 + $0x8] sm:$0xff] %v405
                %v407 = vld [vmem:[%s401 + $0x20] sm:$0xff]
                %408 = vst [vmem:[%s402 + $0x10] sm:$0xff] %v407
                %v409 = vld [vmem:[%s401 + $0x28] sm:$0xff]
                %410 = vst [vmem:[%s402 + $0x18] sm:$0xff] %v409
                %v411 = vld [vmem:[%s401 + $0x40] sm:$0xff]
                %412 = vst [vmem:[%s402 + $0x20] sm:$0xff] %v411
                %v413 = vld [vmem:[%s401 + $0x48] sm:$0xff]
                %414 = vst [vmem:[%s402 + $0x28] sm:$0xff] %v413
              $region81: #{autoencoder_forward.1} parent=75 // loop_footer
                %s400 = sadd.s32 1, %s396
              $region82: #{autoencoder_forward.1} parent=75 // loop_footer_branch
                %395 = sbr.rel target = $region78
              $region83: #{autoencoder_forward.1} parent=75 // loop_exit
                _
            $region76: #{autoencoder_forward.1} parent=71 // pred_fallthru
              _
            // Predicated region
            $region84: #{autoencoder_forward.1} parent=71 // pred_check
              _
            $region85: #{autoencoder_forward.1} parent=71 // pred_check_branch
              %416 = sbr.rel target = $region87
            $region86: #{autoencoder_forward.1} parent=71 // pred_region
              _
            $region87: #{autoencoder_forward.1} parent=71 // pred_fallthru
              _
          $region72: #{autoencoder_forward.1} parent=67 // pred_fallthru
            _
          %417 = vnop
        $region68: #{autoencoder_forward.1} parent=63 // pred_fallthru
          _
      $region64: #{autoencoder_forward.1} parent=5 // pred_fallthru
        _
      %p418 = scmp.le.s32.totalorder 1, %s22
      %p419 = scmp.lt.s32.totalorder %s22, 3
      %p420 = pnand %p418, %p419
      %p421 = pneg %p420
      // Predicated region
      $region88: #{autoencoder_forward.1} parent=5 // pred_check
        _
      $region89: #{autoencoder_forward.1} parent=5 // pred_check_branch
        %423 = sbr.rel (%p420) target = $region91
      $region90: #{autoencoder_forward.1} parent=5 // pred_region
        %s424 = ssub.s32 %s22, 1
        %s425 = sand.u32 %s35, 1
        %s426 = sand.u32 %s35, 1
        %s427 = smul.addr %s426, 48
        %s428 = scalar_lea.vmem [#allocation2], %s427
        // Predicated region
        $region92: #{autoencoder_forward.1} parent=90 // pred_check
          %p429 = pneg %p48
        $region93: #{autoencoder_forward.1} parent=90 // pred_check_branch
          %431 = sbr.rel (%p429) target = $region95
        $region94: #{autoencoder_forward.1} parent=90 // pred_region
          _
        $region95: #{autoencoder_forward.1} parent=90 // pred_fallthru
          _
        %s432 = sand.u32 %s35, 1
        %s433 = sand.u32 %s35, 1
        %s434 = smul.addr %s433, 48
        %s435 = scalar_lea.vmem [#allocation2], %s434
        %p436 = pneg %p48
        %p437 = pneg %p45
        %p438 = pneg %p69
        %p439 = pneg %p66
        %p440 = pneg %p90
        %p441 = pneg %p87
        %p442 = pneg %p111
        %p443 = pneg %p108
        %p444 = pneg %p132
        %p445 = pneg %p129
        %p446 = pneg %p153
        %p447 = pneg %p150
        %p448 = pneg %p174
        %p449 = pneg %p171
        %p450 = pneg %p195
        %p451 = pneg %p192
        %p452 = pneg %p216
        %p453 = pneg %p213
        %p454 = pneg %p237
        %p455 = pneg %p234
        %p456 = pneg %p258
        %p457 = pneg %p255
        %p458 = pneg %p279
        %p459 = pneg %p276
        %p460 = pneg %p300
        %p461 = pneg %p297
        %p462 = pneg %p326
        %p463 = pneg %p323
        %s464 = sand.u32 %s313, 1
        %s465 = scalar_lea.sflag [#allocation4], %s464
        %s466 = sand.u32 %s313, 1
        %s467 = smul.addr %s466, 48
        %s468 = scalar_lea.vmem [#allocation3], %s467
        %s469 = smul.u32 2, %s27
        %s470 = smul.u32 2, %s27
        %v471 = vld [vmem:[%s428] sm:$0xff]
        %v472 = vld [vmem:[%s428 + $0x8] sm:$0xff]
        %v473 = vld [vmem:[%s428 + $0x10] sm:$0xff]
        %v474 = vld [vmem:[%s428 + $0x18] sm:$0xff]
        %v475 = vld [vmem:[%s428 + $0x20] sm:$0x7]
        %v476 = vld [vmem:[%s428 + $0x28] sm:$0x7]
        %v477 = vld [vmem:[%s1] sm:$0xff]
        %v478 = vld [vmem:[%s1 + $0x8] sm:$0x7f]
        %v479 = vld [vmem:[%s2] sm:$0xff]
        %v480 = vld [vmem:[%s2 + $0x8] sm:$0x7f]
        %482 = vset.pattern.permute.xlu0 0
        %483 = vperm.xlu0 %482, %v479
        %v484 = vpop.permute.xlu0 %483
        %487 = vset.pattern.permute.xlu0 0
        %488 = vperm.xlu0 %487, %v480
        %v489 = vpop.permute.xlu0 %488
        %vm491 = vcmask 154624
        %v493 = vsel %vm491, %v477, 0
        %v496 = vsel %vm491, %v478, 0
        %vm498 = vcmask 1042432
        %v500 = vsel %vm498, %v475, 0
        %v503 = vsel %vm498, %v476, 0
        %505 = vmatprep.subr.mxu0 %v472
        %506 = vmatpush1.msra.mxu0 %v471
        %507 = vmatprep.subr.mxu0 %v474
        %508 = vmatpush1.msra.mxu0 %v473
        %509 = vmatprep.subr.mxu0 %v503
        %510 = vmatpush1.msra.mxu0 %v500
        %511 = vmatprep.subr.mxu0 0.0
        %512 = vmatpush1.msra.mxu0 0.0
        %513 = vmatprep.subr.mxu0 0.0
        %514 = vmatpush1.msra.mxu0 0.0
        %515 = vmatprep.subr.mxu0 0.0
        %516 = vmatpush1.msra.mxu0 0.0
        %517 = vmatprep.subr.mxu0 0.0
        %518 = vmatpush1.msra.mxu0 0.0
        %519 = vmatprep.subr.mxu0 0.0
        %520 = vmatpush1.msra.mxu0 0.0
        %521 = vmatprep.subr.mxu0 0.0
        %522 = vmatpush1.msra.mxu0 0.0
        %523 = vmatprep.subr.mxu0 0.0
        %524 = vmatpush1.msra.mxu0 0.0
        %525 = vmatprep.subr.mxu0 0.0
        %526 = vmatpush1.msra.mxu0 0.0
        %527 = vmatprep.subr.mxu0 0.0
        %528 = vmatpush1.msra.mxu0 0.0
        %529 = vmatprep.subr.mxu0 0.0
        %530 = vmatpush1.msra.mxu0 0.0
        %531 = vmatprep.subr.mxu0 0.0
        %532 = vmatpush1.msra.mxu0 0.0
        %533 = vmatprep.subr.mxu0 0.0
        %534 = vmatpush1.msra.mxu0 0.0
        %535 = vmatprep.subr.mxu0 0.0
        %536 = vmatpush1.msra.mxu0 0.0
        %537 = vmatprep.subr.mxu0 0.0
        %538 = vmatpush1.msra.mxu0 0.0
        %539 = vmatprep.subr.mxu0 0.0
        %540 = vmatpush1.msra.mxu0 0.0
        %541 = vmatprep.subr.mxu0 0.0
        %542 = vmatpush1.msra.mxu0 0.0
        %543 = vmatprep.subr.mxu0 0.0
        %544 = vmatpush1.msra.mxu0 0.0
        %545 = vmatprep.subr.mxu0 0.0
        %546 = vmatpush1.msra.mxu0 0.0
        %547 = vmatprep.subr.mxu0 0.0
        %548 = vmatpush1.msra.mxu0 0.0
        %549 = vmatprep.subr.mxu0 0.0
        %550 = vmatpush1.msra.mxu0 0.0
        %551 = vmatprep.subr.mxu0 0.0
        %552 = vmatpush1.msra.mxu0 0.0
        %553 = vmatprep.subr.mxu0 0.0
        %554 = vmatpush1.msra.mxu0 0.0
        %555 = vmatprep.subr.mxu0 0.0
        %556 = vmatpush1.msra.mxu0 0.0
        %557 = vmatprep.subr.mxu0 0.0
        %558 = vmatpush1.msra.mxu0 0.0
        %559 = vmatprep.subr.mxu0 0.0
        %560 = vmatpush1.msra.mxu0 0.0
        %561 = vmatprep.subr.mxu0 0.0
        %562 = vmatpush1.msra.mxu0 0.0
        %563 = vmatprep.subr.mxu0 0.0
        %564 = vmatpush1.msra.mxu0 0.0
        %565 = vmatprep.subr.mxu0 0.0
        %566 = vmatpush1.msra.mxu0 0.0
        %567 = vmatprep.subr.mxu0 0.0
        %568 = vmatpush1.msra.mxu0 0.0
        %569 = vmatprep.mubr.f32.mxu0 0.0
        %570 = vmatmul.mubr.f32.gmra.mrb[0].mxu0 %v493
        %v571 = vpop.f32.mrb[0].mxu0
        %v572 = vadd.f32 %v484, %v571
        %v573 = vpop.f32.mrb[0].mxu0
        %v574 = vadd.f32 %v484, %v573
        %575 = vmatprep.mubr.f32.mxu0 0.0
        %576 = vmatmul.mubr.f32.gmra.mrb[0].mxu0 %v496
        %v577 = vpop.f32.mrb[0].mxu0
        %v578 = vadd.f32 %v489, %v577
        %v579 = vpop.f32.mrb[0].mxu0
        %v580 = vadd.f32 %v489, %v579
        %581 = vdwg.mxu0
        %v582 = vmax.f32 %v572, 0.0
        %v583 = vmax.f32 %v574, 0.0
        %v584 = vmax.f32 %v578, 0.0
        %v585 = vmax.f32 %v580, 0.0
        %v586 = vld [vmem:[%s3] sm:$0xff]
        %v587 = vld [vmem:[%s3 + $0x8] sm:$0xf]
        %v588 = vld [vmem:[%s4] sm:$0xff]
        %v589 = vld [vmem:[%s4 + $0x8] sm:$0xf]
        %591 = vset.pattern.permute.xlu0 0
        %592 = vperm.xlu0 %591, %v588
        %v593 = vpop.permute.xlu0 %592
        %596 = vset.pattern.permute.xlu0 0
        %597 = vperm.xlu0 %596, %v589
        %v598 = vpop.permute.xlu0 %597
        %vm600 = vcmask 121856
        %v602 = vsel %vm600, %v586, 0
        %v605 = vsel %vm600, %v587, 0
        %vm607 = vcmask 1046528
        %v609 = vsel %vm607, %v584, 0
        %v612 = vsel %vm607, %v585, 0
        %614 = vmatprep.subr.mxu0 %v583
        %615 = vmatpush1.msra.mxu0 %v582
        %616 = vmatprep.subr.mxu0 %v612
        %617 = vmatpush1.msra.mxu0 %v609
        %618 = vmatprep.subr.mxu0 0.0
        %619 = vmatpush1.msra.mxu0 0.0
        %620 = vmatprep.subr.mxu0 0.0
        %621 = vmatpush1.msra.mxu0 0.0
        %622 = vmatprep.subr.mxu0 0.0
        %623 = vmatpush1.msra.mxu0 0.0
        %624 = vmatprep.subr.mxu0 0.0
        %625 = vmatpush1.msra.mxu0 0.0
        %626 = vmatprep.subr.mxu0 0.0
        %627 = vmatpush1.msra.mxu0 0.0
        %628 = vmatprep.subr.mxu0 0.0
        %629 = vmatpush1.msra.mxu0 0.0
        %630 = vmatprep.subr.mxu0 0.0
        %631 = vmatpush1.msra.mxu0 0.0
        %632 = vmatprep.subr.mxu0 0.0
        %633 = vmatpush1.msra.mxu0 0.0
        %634 = vmatprep.subr.mxu0 0.0
        %635 = vmatpush1.msra.mxu0 0.0
        %636 = vmatprep.subr.mxu0 0.0
        %637 = vmatpush1.msra.mxu0 0.0
        %638 = vmatprep.subr.mxu0 0.0
        %639 = vmatpush1.msra.mxu0 0.0
        %640 = vmatprep.subr.mxu0 0.0
        %641 = vmatpush1.msra.mxu0 0.0
        %642 = vmatprep.subr.mxu0 0.0
        %643 = vmatpush1.msra.mxu0 0.0
        %644 = vmatprep.subr.mxu0 0.0
        %645 = vmatpush1.msra.mxu0 0.0
        %646 = vmatprep.subr.mxu0 0.0
        %647 = vmatpush1.msra.mxu0 0.0
        %648 = vmatprep.subr.mxu0 0.0
        %649 = vmatpush1.msra.mxu0 0.0
        %650 = vmatprep.subr.mxu0 0.0
        %651 = vmatpush1.msra.mxu0 0.0
        %652 = vmatprep.subr.mxu0 0.0
        %653 = vmatpush1.msra.mxu0 0.0
        %654 = vmatprep.subr.mxu0 0.0
        %655 = vmatpush1.msra.mxu0 0.0
        %656 = vmatprep.subr.mxu0 0.0
        %657 = vmatpush1.msra.mxu0 0.0
        %658 = vmatprep.subr.mxu0 0.0
        %659 = vmatpush1.msra.mxu0 0.0
        %660 = vmatprep.subr.mxu0 0.0
        %661 = vmatpush1.msra.mxu0 0.0
        %662 = vmatprep.subr.mxu0 0.0
        %663 = vmatpush1.msra.mxu0 0.0
        %664 = vmatprep.subr.mxu0 0.0
        %665 = vmatpush1.msra.mxu0 0.0
        %666 = vmatprep.subr.mxu0 0.0
        %667 = vmatpush1.msra.mxu0 0.0
        %668 = vmatprep.subr.mxu0 0.0
        %669 = vmatpush1.msra.mxu0 0.0
        %670 = vmatprep.subr.mxu0 0.0
        %671 = vmatpush1.msra.mxu0 0.0
        %672 = vmatprep.subr.mxu0 0.0
        %673 = vmatpush1.msra.mxu0 0.0
        %674 = vmatprep.subr.mxu0 0.0
        %675 = vmatpush1.msra.mxu0 0.0
        %676 = vmatprep.subr.mxu0 0.0
        %677 = vmatpush1.msra.mxu0 0.0
        %678 = vmatprep.mubr.f32.mxu0 0.0
        %679 = vmatmul.mubr.f32.gmra.mrb[0].mxu0 %v602
        %v680 = vpop.f32.mrb[0].mxu0
        %v681 = vadd.f32 %v593, %v680
        %v682 = vpop.f32.mrb[0].mxu0
        %v683 = vadd.f32 %v593, %v682
        %684 = vmatprep.mubr.f32.mxu0 0.0
        %685 = vmatmul.mubr.f32.gmra.mrb[0].mxu0 %v605
        %v686 = vpop.f32.mrb[0].mxu0
        %v687 = vadd.f32 %v598, %v686
        %v688 = vpop.f32.mrb[0].mxu0
        %v689 = vadd.f32 %v598, %v688
        %690 = vdwg.mxu0
        %v691 = vmax.f32 %v681, 0.0
        %v692 = vmax.f32 %v683, 0.0
        %v693 = vmax.f32 %v687, 0.0
        %v694 = vmax.f32 %v689, 0.0
        %v695 = vld [vmem:[%s5] sm:$0xff]
        %v696 = vld [vmem:[%s6] sm:$0xff]
        %698 = vset.pattern.permute.xlu0 0
        %699 = vperm.xlu0 %698, %v696
        %v700 = vpop.permute.xlu0 %699
        %vm702 = vcmask 97280
        %v704 = vsel %vm702, %v695, 0
        %vm706 = vcmask 1043456
        %v708 = vsel %vm706, %v693, 0
        %v711 = vsel %vm706, %v694, 0
        %713 = vmatprep.subr.mxu0 %v692
        %714 = vmatpush1.msra.mxu0 %v691
        %715 = vmatprep.subr.mxu0 %v711
        %716 = vmatpush1.msra.mxu0 %v708
        %717 = vmatprep.subr.mxu0 0.0
        %718 = vmatpush1.msra.mxu0 0.0
        %719 = vmatprep.subr.mxu0 0.0
        %720 = vmatpush1.msra.mxu0 0.0
        %721 = vmatprep.subr.mxu0 0.0
        %722 = vmatpush1.msra.mxu0 0.0
        %723 = vmatprep.subr.mxu0 0.0
        %724 = vmatpush1.msra.mxu0 0.0
        %725 = vmatprep.subr.mxu0 0.0
        %726 = vmatpush1.msra.mxu0 0.0
        %727 = vmatprep.subr.mxu0 0.0
        %728 = vmatpush1.msra.mxu0 0.0
        %729 = vmatprep.subr.mxu0 0.0
        %730 = vmatpush1.msra.mxu0 0.0
        %731 = vmatprep.subr.mxu0 0.0
        %732 = vmatpush1.msra.mxu0 0.0
        %733 = vmatprep.subr.mxu0 0.0
        %734 = vmatpush1.msra.mxu0 0.0
        %735 = vmatprep.subr.mxu0 0.0
        %736 = vmatpush1.msra.mxu0 0.0
        %737 = vmatprep.subr.mxu0 0.0
        %738 = vmatpush1.msra.mxu0 0.0
        %739 = vmatprep.subr.mxu0 0.0
        %740 = vmatpush1.msra.mxu0 0.0
        %741 = vmatprep.subr.mxu0 0.0
        %742 = vmatpush1.msra.mxu0 0.0
        %743 = vmatprep.subr.mxu0 0.0
        %744 = vmatpush1.msra.mxu0 0.0
        %745 = vmatprep.subr.mxu0 0.0
        %746 = vmatpush1.msra.mxu0 0.0
        %747 = vmatprep.subr.mxu0 0.0
        %748 = vmatpush1.msra.mxu0 0.0
        %749 = vmatprep.subr.mxu0 0.0
        %750 = vmatpush1.msra.mxu0 0.0
        %751 = vmatprep.subr.mxu0 0.0
        %752 = vmatpush1.msra.mxu0 0.0
        %753 = vmatprep.subr.mxu0 0.0
        %754 = vmatpush1.msra.mxu0 0.0
        %755 = vmatprep.subr.mxu0 0.0
        %756 = vmatpush1.msra.mxu0 0.0
        %757 = vmatprep.subr.mxu0 0.0
        %758 = vmatpush1.msra.mxu0 0.0
        %759 = vmatprep.subr.mxu0 0.0
        %760 = vmatpush1.msra.mxu0 0.0
        %761 = vmatprep.subr.mxu0 0.0
        %762 = vmatpush1.msra.mxu0 0.0
        %763 = vmatprep.subr.mxu0 0.0
        %764 = vmatpush1.msra.mxu0 0.0
        %765 = vmatprep.subr.mxu0 0.0
        %766 = vmatpush1.msra.mxu0 0.0
        %767 = vmatprep.subr.mxu0 0.0
        %768 = vmatpush1.msra.mxu0 0.0
        %769 = vmatprep.subr.mxu0 0.0
        %770 = vmatpush1.msra.mxu0 0.0
        %771 = vmatprep.subr.mxu0 0.0
        %772 = vmatpush1.msra.mxu0 0.0
        %773 = vmatprep.subr.mxu0 0.0
        %774 = vmatpush1.msra.mxu0 0.0
        %775 = vmatprep.subr.mxu0 0.0
        %776 = vmatpush1.msra.mxu0 0.0
        %777 = vmatprep.mubr.f32.mxu0 0.0
        %778 = vmatmul.mubr.f32.gmra.mrb[0].mxu0 %v704
        %v779 = vpop.f32.mrb[0].mxu0
        %v780 = vadd.f32 %v700, %v779
        %v781 = vpop.f32.mrb[0].mxu0
        %v782 = vadd.f32 %v700, %v781
        %783 = vdwg.mxu0
        %v784 = vld [vmem:[%s7] sm:$0xff]
        %v785 = vld [vmem:[%s7 + $0x8] sm:$0xf]
        %v786 = vld [vmem:[%s8] sm:$0xff]
        %v787 = vld [vmem:[%s8 + $0x8] sm:$0xf]
        %789 = vset.pattern.permute.xlu0 0
        %790 = vperm.xlu0 %789, %v786
        %v791 = vpop.permute.xlu0 %790
        %794 = vset.pattern.permute.xlu0 0
        %795 = vperm.xlu0 %794, %v787
        %v796 = vpop.permute.xlu0 %795
        %vm798 = vcmask 64512
        %v800 = vsel %vm798, %v784, 0
        %v803 = vsel %vm798, %v785, 0
        %805 = vmatprep.subr.mxu0 %v782
        %806 = vmatpush1.msra.mxu0 %v780
        %807 = vmatprep.subr.mxu0 0.0
        %808 = vmatpush1.msra.mxu0 0.0
        %809 = vmatprep.subr.mxu0 0.0
        %810 = vmatpush1.msra.mxu0 0.0
        %811 = vmatprep.subr.mxu0 0.0
        %812 = vmatpush1.msra.mxu0 0.0
        %813 = vmatprep.subr.mxu0 0.0
        %814 = vmatpush1.msra.mxu0 0.0
        %815 = vmatprep.subr.mxu0 0.0
        %816 = vmatpush1.msra.mxu0 0.0
        %817 = vmatprep.subr.mxu0 0.0
        %818 = vmatpush1.msra.mxu0 0.0
        %819 = vmatprep.subr.mxu0 0.0
        %820 = vmatpush1.msra.mxu0 0.0
        %821 = vmatprep.subr.mxu0 0.0
        %822 = vmatpush1.msra.mxu0 0.0
        %823 = vmatprep.subr.mxu0 0.0
        %824 = vmatpush1.msra.mxu0 0.0
        %825 = vmatprep.subr.mxu0 0.0
        %826 = vmatpush1.msra.mxu0 0.0
        %827 = vmatprep.subr.mxu0 0.0
        %828 = vmatpush1.msra.mxu0 0.0
        %829 = vmatprep.subr.mxu0 0.0
        %830 = vmatpush1.msra.mxu0 0.0
        %831 = vmatprep.subr.mxu0 0.0
        %832 = vmatpush1.msra.mxu0 0.0
        %833 = vmatprep.subr.mxu0 0.0
        %834 = vmatpush1.msra.mxu0 0.0
        %835 = vmatprep.subr.mxu0 0.0
        %836 = vmatpush1.msra.mxu0 0.0
        %837 = vmatprep.subr.mxu0 0.0
        %838 = vmatpush1.msra.mxu0 0.0
        %839 = vmatprep.subr.mxu0 0.0
        %840 = vmatpush1.msra.mxu0 0.0
        %841 = vmatprep.subr.mxu0 0.0
        %842 = vmatpush1.msra.mxu0 0.0
        %843 = vmatprep.subr.mxu0 0.0
        %844 = vmatpush1.msra.mxu0 0.0
        %845 = vmatprep.subr.mxu0 0.0
        %846 = vmatpush1.msra.mxu0 0.0
        %847 = vmatprep.subr.mxu0 0.0
        %848 = vmatpush1.msra.mxu0 0.0
        %849 = vmatprep.subr.mxu0 0.0
        %850 = vmatpush1.msra.mxu0 0.0
        %851 = vmatprep.subr.mxu0 0.0
        %852 = vmatpush1.msra.mxu0 0.0
        %853 = vmatprep.subr.mxu0 0.0
        %854 = vmatpush1.msra.mxu0 0.0
        %855 = vmatprep.subr.mxu0 0.0
        %856 = vmatpush1.msra.mxu0 0.0
        %857 = vmatprep.subr.mxu0 0.0
        %858 = vmatpush1.msra.mxu0 0.0
        %859 = vmatprep.subr.mxu0 0.0
        %860 = vmatpush1.msra.mxu0 0.0
        %861 = vmatprep.subr.mxu0 0.0
        %862 = vmatpush1.msra.mxu0 0.0
        %863 = vmatprep.subr.mxu0 0.0
        %864 = vmatpush1.msra.mxu0 0.0
        %865 = vmatprep.subr.mxu0 0.0
        %866 = vmatpush1.msra.mxu0 0.0
        %867 = vmatprep.subr.mxu0 0.0
        %868 = vmatpush1.msra.mxu0 0.0
        %869 = vmatprep.mubr.f32.mxu0 0.0
        %870 = vmatmul.mubr.f32.gmra.mrb[0].mxu0 %v800
        %v871 = vpop.f32.mrb[0].mxu0
        %v872 = vadd.f32 %v791, %v871
        %v873 = vpop.f32.mrb[0].mxu0
        %v874 = vadd.f32 %v791, %v873
        %875 = vmatprep.mubr.f32.mxu0 0.0
        %876 = vmatmul.mubr.f32.gmra.mrb[0].mxu0 %v803
        %v877 = vpop.f32.mrb[0].mxu0
        %v878 = vadd.f32 %v796, %v877
        %v879 = vpop.f32.mrb[0].mxu0
        %v880 = vadd.f32 %v796, %v879
        %881 = vdwg.mxu0
        %v882 = vmax.f32 %v872, 0.0
        %v883 = vmax.f32 %v874, 0.0
        %v884 = vmax.f32 %v878, 0.0
        %v885 = vmax.f32 %v880, 0.0
        %v886 = vld [vmem:[%s9] sm:$0xff]
        %v887 = vld [vmem:[%s9 + $0x8] sm:$0x7f]
        %v888 = vld [vmem:[%s10] sm:$0xff]
        %v889 = vld [vmem:[%s10 + $0x8] sm:$0x7f]
        %891 = vset.pattern.permute.xlu0 0
        %892 = vperm.xlu0 %891, %v888
        %v893 = vpop.permute.xlu0 %892
        %896 = vset.pattern.permute.xlu0 0
        %897 = vperm.xlu0 %896, %v889
        %v898 = vpop.permute.xlu0 %897
        %v901 = vsel %vm702, %v886, 0
        %v904 = vsel %vm702, %v887, 0
        %v907 = vsel %vm706, %v884, 0
        %v910 = vsel %vm706, %v885, 0
        %912 = vmatprep.subr.mxu0 %v883
        %913 = vmatpush1.msra.mxu0 %v882
        %914 = vmatprep.subr.mxu0 %v910
        %915 = vmatpush1.msra.mxu0 %v907
        %916 = vmatprep.subr.mxu0 0.0
        %917 = vmatpush1.msra.mxu0 0.0
        %918 = vmatprep.subr.mxu0 0.0
        %919 = vmatpush1.msra.mxu0 0.0
        %920 = vmatprep.subr.mxu0 0.0
        %921 = vmatpush1.msra.mxu0 0.0
        %922 = vmatprep.subr.mxu0 0.0
        %923 = vmatpush1.msra.mxu0 0.0
        %924 = vmatprep.subr.mxu0 0.0
        %925 = vmatpush1.msra.mxu0 0.0
        %926 = vmatprep.subr.mxu0 0.0
        %927 = vmatpush1.msra.mxu0 0.0
        %928 = vmatprep.subr.mxu0 0.0
        %929 = vmatpush1.msra.mxu0 0.0
        %930 = vmatprep.subr.mxu0 0.0
        %931 = vmatpush1.msra.mxu0 0.0
        %932 = vmatprep.subr.mxu0 0.0
        %933 = vmatpush1.msra.mxu0 0.0
        %934 = vmatprep.subr.mxu0 0.0
        %935 = vmatpush1.msra.mxu0 0.0
        %936 = vmatprep.subr.mxu0 0.0
        %937 = vmatpush1.msra.mxu0 0.0
        %938 = vmatprep.subr.mxu0 0.0
        %939 = vmatpush1.msra.mxu0 0.0
        %940 = vmatprep.subr.mxu0 0.0
        %941 = vmatpush1.msra.mxu0 0.0
        %942 = vmatprep.subr.mxu0 0.0
        %943 = vmatpush1.msra.mxu0 0.0
        %944 = vmatprep.subr.mxu0 0.0
        %945 = vmatpush1.msra.mxu0 0.0
        %946 = vmatprep.subr.mxu0 0.0
        %947 = vmatpush1.msra.mxu0 0.0
        %948 = vmatprep.subr.mxu0 0.0
        %949 = vmatpush1.msra.mxu0 0.0
        %950 = vmatprep.subr.mxu0 0.0
        %951 = vmatpush1.msra.mxu0 0.0
        %952 = vmatprep.subr.mxu0 0.0
        %953 = vmatpush1.msra.mxu0 0.0
        %954 = vmatprep.subr.mxu0 0.0
        %955 = vmatpush1.msra.mxu0 0.0
        %956 = vmatprep.subr.mxu0 0.0
        %957 = vmatpush1.msra.mxu0 0.0
        %958 = vmatprep.subr.mxu0 0.0
        %959 = vmatpush1.msra.mxu0 0.0
        %960 = vmatprep.subr.mxu0 0.0
        %961 = vmatpush1.msra.mxu0 0.0
        %962 = vmatprep.subr.mxu0 0.0
        %963 = vmatpush1.msra.mxu0 0.0
        %964 = vmatprep.subr.mxu0 0.0
        %965 = vmatpush1.msra.mxu0 0.0
        %966 = vmatprep.subr.mxu0 0.0
        %967 = vmatpush1.msra.mxu0 0.0
        %968 = vmatprep.subr.mxu0 0.0
        %969 = vmatpush1.msra.mxu0 0.0
        %970 = vmatprep.subr.mxu0 0.0
        %971 = vmatpush1.msra.mxu0 0.0
        %972 = vmatprep.subr.mxu0 0.0
        %973 = vmatpush1.msra.mxu0 0.0
        %974 = vmatprep.subr.mxu0 0.0
        %975 = vmatpush1.msra.mxu0 0.0
        %976 = vmatprep.mubr.f32.mxu0 0.0
        %977 = vmatmul.mubr.f32.gmra.mrb[0].mxu0 %v901
        %v978 = vpop.f32.mrb[0].mxu0
        %v979 = vadd.f32 %v893, %v978
        %v980 = vpop.f32.mrb[0].mxu0
        %v981 = vadd.f32 %v893, %v980
        %982 = vmatprep.mubr.f32.mxu0 0.0
        %983 = vmatmul.mubr.f32.gmra.mrb[0].mxu0 %v904
        %v984 = vpop.f32.mrb[0].mxu0
        %v985 = vadd.f32 %v898, %v984
        %v986 = vpop.f32.mrb[0].mxu0
        %v987 = vadd.f32 %v898, %v986
        %988 = vdwg.mxu0
        %v989 = vmax.f32 %v979, 0.0
        %v990 = vmax.f32 %v981, 0.0
        %v991 = vmax.f32 %v985, 0.0
        %v992 = vmax.f32 %v987, 0.0
        %v993 = vld [vmem:[%s11] sm:$0xff]
        %v994 = vld [vmem:[%s11 + $0x8] sm:$0xff]
        %v995 = vld [vmem:[%s11 + $0x10] sm:$0x7]
        %v996 = vld [vmem:[%s12] sm:$0xff]
        %v997 = vld [vmem:[%s12 + $0x8] sm:$0xff]
        %v998 = vld [vmem:[%s12 + $0x10] sm:$0x7]
        %1000 = vset.pattern.permute.xlu0 0
        %1001 = vperm.xlu0 %1000, %v996
        %v1002 = vpop.permute.xlu0 %1001
        %1005 = vset.pattern.permute.xlu0 0
        %1006 = vperm.xlu0 %1005, %v997
        %v1007 = vpop.permute.xlu0 %1006
        %1010 = vset.pattern.permute.xlu0 0
        %1011 = vperm.xlu0 %1010, %v998
        %v1012 = vpop.permute.xlu0 %1011
        %v1015 = vsel %vm600, %v993, 0
        %v1018 = vsel %vm600, %v994, 0
        %v1021 = vsel %vm600, %v995, 0
        %v1024 = vsel %vm607, %v991, 0
        %v1027 = vsel %vm607, %v992, 0
        %1029 = vmatprep.subr.mxu0 %v990
        %1030 = vmatpush1.msra.mxu0 %v989
        %1031 = vmatprep.subr.mxu0 %v1027
        %1032 = vmatpush1.msra.mxu0 %v1024
        %1033 = vmatprep.subr.mxu0 0.0
        %1034 = vmatpush1.msra.mxu0 0.0
        %1035 = vmatprep.subr.mxu0 0.0
        %1036 = vmatpush1.msra.mxu0 0.0
        %1037 = vmatprep.subr.mxu0 0.0
        %1038 = vmatpush1.msra.mxu0 0.0
        %1039 = vmatprep.subr.mxu0 0.0
        %1040 = vmatpush1.msra.mxu0 0.0
        %1041 = vmatprep.subr.mxu0 0.0
        %1042 = vmatpush1.msra.mxu0 0.0
        %1043 = vmatprep.subr.mxu0 0.0
        %1044 = vmatpush1.msra.mxu0 0.0
        %1045 = vmatprep.subr.mxu0 0.0
        %1046 = vmatpush1.msra.mxu0 0.0
        %1047 = vmatprep.subr.mxu0 0.0
        %1048 = vmatpush1.msra.mxu0 0.0
        %1049 = vmatprep.subr.mxu0 0.0
        %1050 = vmatpush1.msra.mxu0 0.0
        %1051 = vmatprep.subr.mxu0 0.0
        %1052 = vmatpush1.msra.mxu0 0.0
        %1053 = vmatprep.subr.mxu0 0.0
        %1054 = vmatpush1.msra.mxu0 0.0
        %1055 = vmatprep.subr.mxu0 0.0
        %1056 = vmatpush1.msra.mxu0 0.0
        %1057 = vmatprep.subr.mxu0 0.0
        %1058 = vmatpush1.msra.mxu0 0.0
        %1059 = vmatprep.subr.mxu0 0.0
        %1060 = vmatpush1.msra.mxu0 0.0
        %1061 = vmatprep.subr.mxu0 0.0
        %1062 = vmatpush1.msra.mxu0 0.0
        %1063 = vmatprep.subr.mxu0 0.0
        %1064 = vmatpush1.msra.mxu0 0.0
        %1065 = vmatprep.subr.mxu0 0.0
        %1066 = vmatpush1.msra.mxu0 0.0
        %1067 = vmatprep.subr.mxu0 0.0
        %1068 = vmatpush1.msra.mxu0 0.0
        %1069 = vmatprep.subr.mxu0 0.0
        %1070 = vmatpush1.msra.mxu0 0.0
        %1071 = vmatprep.subr.mxu0 0.0
        %1072 = vmatpush1.msra.mxu0 0.0
        %1073 = vmatprep.subr.mxu0 0.0
        %1074 = vmatpush1.msra.mxu0 0.0
        %1075 = vmatprep.subr.mxu0 0.0
        %1076 = vmatpush1.msra.mxu0 0.0
        %1077 = vmatprep.subr.mxu0 0.0
        %1078 = vmatpush1.msra.mxu0 0.0
        %1079 = vmatprep.subr.mxu0 0.0
        %1080 = vmatpush1.msra.mxu0 0.0
        %1081 = vmatprep.subr.mxu0 0.0
        %1082 = vmatpush1.msra.mxu0 0.0
        %1083 = vmatprep.subr.mxu0 0.0
        %1084 = vmatpush1.msra.mxu0 0.0
        %1085 = vmatprep.subr.mxu0 0.0
        %1086 = vmatpush1.msra.mxu0 0.0
        %1087 = vmatprep.subr.mxu0 0.0
        %1088 = vmatpush1.msra.mxu0 0.0
        %1089 = vmatprep.subr.mxu0 0.0
        %1090 = vmatpush1.msra.mxu0 0.0
        %1091 = vmatprep.subr.mxu0 0.0
        %1092 = vmatpush1.msra.mxu0 0.0
        %1093 = vmatprep.mubr.f32.mxu0 0.0
        %1094 = vmatmul.mubr.f32.gmra.mrb[0].mxu0 %v1015
        %v1095 = vpop.f32.mrb[0].mxu0
        %v1096 = vadd.f32 %v1002, %v1095
        %v1097 = vpop.f32.mrb[0].mxu0
        %v1098 = vadd.f32 %v1002, %v1097
        %1099 = vmatprep.mubr.f32.mxu0 0.0
        %1100 = vmatmul.mubr.f32.gmra.mrb[0].mxu0 %v1018
        %v1101 = vpop.f32.mrb[0].mxu0
        %v1102 = vadd.f32 %v1007, %v1101
        %v1103 = vpop.f32.mrb[0].mxu0
        %v1104 = vadd.f32 %v1007, %v1103
        %1105 = vmatprep.mubr.f32.mxu0 0.0
        %1106 = vmatmul.mubr.f32.gmra.mrb[0].mxu0 %v1021
        %v1107 = vpop.f32.mrb[0].mxu0
        %v1108 = vadd.f32 %v1012, %v1107
        %v1109 = vpop.f32.mrb[0].mxu0
        %v1110 = vadd.f32 %v1012, %v1109
        %1111 = vdwg.mxu0
        %v1112 = vsub.f32 0.0, %v1096
        %v1113 = vsub.f32 0.0, %v1098
        %v1114 = vsub.f32 0.0, %v1102
        %v1115 = vsub.f32 0.0, %v1104
        %v1116 = vsub.f32 0.0, %v1108
        %v1117 = vsub.f32 0.0, %v1110
        %v1118 = vmul.f32 %v1112, 1.442695
        %v1119 = vpow.pop %v1118
        %v1120 = vmul.f32 %v1113, 1.442695
        %v1121 = vpow.pop %v1120
        %v1122 = vmul.f32 %v1114, 1.442695
        %v1123 = vpow.pop %v1122
        %v1124 = vmul.f32 %v1115, 1.442695
        %v1125 = vpow.pop %v1124
        %v1126 = vmul.f32 %v1116, 1.442695
        %v1127 = vpow.pop %v1126
        %v1128 = vmul.f32 %v1117, 1.442695
        %v1129 = vpow.pop %v1128
        %v1130 = vadd.f32 %v1119, 1.0
        %v1131 = vadd.f32 %v1121, 1.0
        %v1132 = vadd.f32 %v1123, 1.0
        %v1133 = vadd.f32 %v1125, 1.0
        %v1134 = vadd.f32 %v1127, 1.0
        %v1135 = vadd.f32 %v1129, 1.0
        %v1136 = vrcp.pop %v1130
        %v1137 = vrcp.pop %v1131
        %v1138 = vrcp.pop %v1132
        %v1139 = vrcp.pop %v1133
        %v1140 = vrcp.pop %v1134
        %v1141 = vrcp.pop %v1135
        %1142 = vst [vmem:[%s468] sm:$0xff] %v1136
        %1143 = vst [vmem:[%s468 + $0x8] sm:$0xff] %v1137
        %1144 = vst [vmem:[%s468 + $0x10] sm:$0xff] %v1138
        %1145 = vst [vmem:[%s468 + $0x18] sm:$0xff] %v1139
        %1146 = vst [vmem:[%s468 + $0x20] sm:$0x7] %v1140
        %1147 = vst [vmem:[%s468 + $0x28] sm:$0x7] %v1141
        %s1148 = sand.u32 %s313, 1
        %s1149 = scalar_lea.sflag [#allocation4], %s1148
        %s1150 = sand.u32 %s313, 1
        %s1151 = smul.addr %s1150, 48
        %s1152 = scalar_lea.vmem [#allocation3], %s1151
        // Predicated region
        $region96: #{autoencoder_forward.1} parent=90 // pred_check
          %p1153 = pneg %p323
        $region97: #{autoencoder_forward.1} parent=90 // pred_check_branch
          %1155 = sbr.rel (%p1153) target = $region99
        $region98: #{autoencoder_forward.1} parent=90 // pred_region
          %s1156 = smul.u32 2, %s27
          %s1158 = ssub.s32 768, 768
          %1159 = vsyncadd %s1149, %s1158
          %s1160 = smul.addr %s1156, 128
          %s1161 = scalar_lea.hbm %s13, %s1160
          %s1162 = sshll.u32 %s1152, 4
          %s1163 = int_to_ptr.vmem [resolvable:$true] %s1162
          %1168 = dma.vmem_to_hbm [thread:$0]  %s1163, 768, %s1161, %s1149, 256, 512, 16
        $region99: #{autoencoder_forward.1} parent=90 // pred_fallthru
          _
      $region91: #{autoencoder_forward.1} parent=5 // pred_fallthru
        _
      %p1169 = scmp.le.s32.totalorder 2, %s22
      // Predicated region
      $region100: #{autoencoder_forward.1} parent=5 // pred_check
        %p1170 = pneg %p1169
      $region101: #{autoencoder_forward.1} parent=5 // pred_check_branch
        %1172 = sbr.rel (%p1170) target = $region103
      $region102: #{autoencoder_forward.1} parent=5 // pred_region
        %s1173 = ssub.s32 %s22, 2
        // Predicated region
        $region104: #{autoencoder_forward.1} parent=102 // pred_check
          %p1174 = pneg %p329
        $region105: #{autoencoder_forward.1} parent=102 // pred_check_branch
          %1176 = sbr.rel (%p1174) target = $region107
        $region106: #{autoencoder_forward.1} parent=102 // pred_region
          %s1177 = sand.u32 %s314, 1
          %s1178 = scalar_lea.sflag [#allocation4], %s1177
          %s1179 = sand.u32 %s314, 1
          %s1180 = smul.addr %s1179, 48
          %s1181 = scalar_lea.vmem [#allocation3], %s1180
          %1182 = dma.done %s1178, 768
        $region107: #{autoencoder_forward.1} parent=102 // pred_fallthru
          _
      $region103: #{autoencoder_forward.1} parent=5 // pred_fallthru
        _
    $region6: #{autoencoder_forward.1} parent=1 // loop_footer
      %s26 = sadd.s32 1, %s22
    $region7: #{autoencoder_forward.1} parent=1 // loop_footer_branch
      %21 = sbr.rel target = $region3
    $region8: #{autoencoder_forward.1} parent=1 // loop_exit
      _
    %1183 = vsyncpa [#allocation4], 1
    %s1184 = scalar_lea.sflag [#allocation4], 1
    %1185 = vsyncpa %s1184, 1

</llo_original>
